<compile_context>
chip_gen: v6e
topology: v6e:2x2x1
jax: 0.10.0
libtpu: 0.0.40
codegen_flags: <defaults>
</compile_context>

<pallas_src>
import math

import jax
import jax.numpy as jnp
import numpy as np
from jax.experimental import pallas as pl
from jax.experimental.pallas import tpu as pltpu


# ----------------------------- Pallas kernel --------------------------------
def _fconv2d_kernel(x_ref, w_ref, o_ref):
    # x_ref: (2*Cin, TP)   w_ref: (2*Cin, TC, TP)   o_ref: (2, TC, TP)
    cin = w_ref.shape[0] // 2
    tc, tp = w_ref.shape[1], w_ref.shape[2]

    def step(j, carry):
        acc_r, acc_i = carry
        wr = w_ref[j]                       # (TC, TP)
        wi = w_ref[cin + j]                 # (TC, TP)
        xr = x_ref[pl.ds(j, 1), :]          # (1, TP) -> broadcast over Cout sublanes
        xi = x_ref[pl.ds(cin + j, 1), :]
        acc_r = acc_r + wr * xr - wi * xi
        acc_i = acc_i + wr * xi + wi * xr
        return acc_r, acc_i

    init = (jnp.zeros((tc, tp), jnp.float32), jnp.zeros((tc, tp), jnp.float32))
    if cin <= 8:
        # fully static unroll: straight-line VPU code, no dynamic indices
        carry = init
        for j in range(cin):
            carry = step(j, carry)
        acc_r, acc_i = carry
    else:
        acc_r, acc_i = jax.lax.fori_loop(0, cin, step, init, unroll=True)

    o_ref[0] = acc_r
    o_ref[1] = acc_i


def _pick_tiles(cout, cin, hw, budget_bytes):
    """Pick (Cout tile, HW lane tile) so the f32 double-buffered working set fits."""
    # Cout tile: full Cout when small, else a multiple of 8 that divides Cout.
    if cout <= 128:
        tc = cout
    else:
        tc = 128
        while tc > 8 and cout % tc:
            tc -= 8
        if cout % tc:
            tc = cout
    # HW lane tile: multiple of 128 dividing HW (unmasked stores), sized by the
    # VMEM budget (weights dominate), capped at 4096 lanes.
    if hw % 128:
        # TODO(synk): fold another axis into the trailing dim when H*W < 128 so
        # stores stay lane-dense; a full-HW block is still correct.
        return tc, hw
    bytes_per_lane = 4 * 2 * (2 * cin * tc + 2 * cin + 2 * tc)  # f32, 2 buffers
    tp = min(hw, 4096, max(128, (budget_bytes // max(bytes_per_lane, 1)) // 128 * 128))
    while tp > 128 and hw % tp:
        tp -= 128
    if hw % tp:
        tp = hw
    return tc, tp


def fconv2d_pallas(fweights, fx):
    """fweights: (Cout, Cin, N, N) complex64, fx: (B, Cin, N, N) complex -> (B, Cout, N, N)."""
    cout, cin, n, _ = fweights.shape
    b = fx.shape[0]
    hw = n * n

    # Pack real/imag halves along a leading channel axis (keeps HBM/VMEM layout
    # lane-dense: no size-2 second-minor dim anywhere).
    fw = fweights.reshape(cout, cin, hw)
    w_packed = jnp.concatenate(
        [jnp.transpose(jnp.real(fw), (1, 0, 2)),
         jnp.transpose(jnp.imag(fw), (1, 0, 2))],
        axis=0,
    ).astype(jnp.float32)                                    # (2*Cin, Cout, HW)

    fxf = fx.reshape(b, cin, hw)
    x_packed = jnp.concatenate(
        [jnp.real(fxf), jnp.imag(fxf)], axis=1
    ).astype(jnp.float32)                                    # (B, 2*Cin, HW)

    # VMEM-aware tile sizing (v7x has 64 MiB/TC vs 128 MiB on v5e/v6e).
    try:
        vmem_cap = int(pltpu.get_tpu_info().vmem_capacity_bytes)
    except Exception:
        vmem_cap = 64 * 1024 * 1024
    vmem_limit = int(min(vmem_cap // 2, 96 * 1024 * 1024))
    tc, tp = _pick_tiles(cout, cin, hw, vmem_limit // 2)

    grid = (cout // tc, hw // tp, b)  # batch innermost -> weight tile reused B times

    x_spec = pl.BlockSpec((None, 2 * cin, tp), lambda co, p, bi: (bi, 0, p))
    w_spec = pl.BlockSpec((2 * cin, tc, tp), lambda co, p, bi: (0, co, p))  # b-invariant
    o_spec = pl.BlockSpec((None, 2, tc, tp), lambda co, p, bi: (bi, 0, co, p))

    cost = pl.CostEstimate(
        flops=8 * b * cout * cin * hw,
        transcendentals=0,
        bytes_accessed=4 * 2 * hw * (cout * cin + b * cin + b * cout),
    )

    out_packed = pl.pallas_call(
        _fconv2d_kernel,
        grid=grid,
        in_specs=[x_spec, w_spec],
        out_specs=o_spec,
        out_shape=jax.ShapeDtypeStruct((b, 2, cout, hw), jnp.float32),
        compiler_params=pltpu.CompilerParams(
            dimension_semantics=("parallel", "parallel", "parallel"),
            vmem_limit_bytes=vmem_limit,
        ),
        cost_estimate=cost,
    )(x_packed, w_packed)

    out = jax.lax.complex(out_packed[:, 0], out_packed[:, 1])  # complex64
    return out.reshape(b, cout, n, n)


# --------------------------- FConv2d (JAX glue) ------------------------------
def construct_shift_matrix(N, y_shift, x_shift):
    n1 = jnp.arange(N)[None, :]   # columns
    n2 = jnp.arange(N)[:, None]   # rows
    return jnp.exp(-2j * jnp.pi * (n1 * x_shift + n2 * y_shift) / N).astype(jnp.complex64)


def xavier_uniform(key, shape):
    # shape = (out_c, in_c, k, k); torch xavier_uniform_ for 4D conv weights
    out_c, in_c, kh, kw = shape
    fan_in = in_c * kh * kw
    fan_out = out_c * kh * kw
    bound = math.sqrt(6.0 / (fan_in + fan_out))
    return jax.random.uniform(key, shape, jnp.float32, -bound, bound)


class FConv2dPallas:
    def __init__(self, in_channels, out_channels, kernel_size, shift_output, key):
        if kernel_size > 5:
            raise RuntimeError("fourier conv is to inacurate!")
        self.kernel_size = kernel_size
        self.in_channels, self.out_channels = in_channels, out_channels
        self.shift_output = shift_output
        self.weights = xavier_uniform(key, (out_channels, in_channels, kernel_size, kernel_size))
        self._fweights_cache = {}  # img_size -> frequency-domain weights

    def get_fweights(self, img_size):
        if (img_size - self.kernel_size) % 2 != 0:
            raise RuntimeError("img_size - self.kernel_size not devidable with 2")
        cached = self._fweights_cache.get(img_size)
        if cached is not None:
            return cached
        pa = img_size - self.kernel_size
        # torch F.pad(pad=(0, pa, 0, pa)) pads last dim (0, pa) and second-last (0, pa)
        W = jnp.pad(self.weights, ((0, 0), (0, 0), (0, pa), (0, pa)))
        fweights = jnp.conj(jnp.fft.fft2(W)).astype(jnp.complex64)
        if self.shift_output:
            shift = construct_shift_matrix(img_size, self.kernel_size // 2, self.kernel_size // 2)
            fweights = fweights * shift
        self._fweights_cache[img_size] = fweights
        return fweights

    def __call__(self, x):
        # x is complex, (B, Cin, N, N) — a stack of per-channel frequency domains
        fweights = self.get_fweights(x.shape[-1])
        return fconv2d_pallas(fweights, x)


# ------------------------------- main ----------------------------------------
if __name__ == "__main__":
    key = jax.random.PRNGKey(0)
    k_w, k_xr, k_xi = jax.random.split(key, 3)

    B, Cin, Cout, N, K = 2, 4, 4, 16, 4   # (N - K) % 2 == 0 required

    module = FConv2dPallas(Cin, Cout, K, shift_output=True, key=k_w)

    xr = jax.random.normal(k_xr, (B, Cin, N, N), jnp.float32)
    xi = jax.random.normal(k_xi, (B, Cin, N, N), jnp.float32)
    x = (xr + 1j * xi).astype(jnp.complex64)

    out = module(x)
    out = jax.block_until_ready(out)

    # self-check against a plain-JAX reference of fconv2d
    fw = module.get_fweights(N)
    ref = jnp.einsum("ojhw,bjhw->bohw", fw, x)
    assert out.shape == (B, Cout, N, N) and out.dtype == jnp.complex64
    np.testing.assert_allclose(np.asarray(out), np.asarray(ref), rtol=1e-4, atol=1e-4)

    print("KERNEL_OK")
</pallas_src>

<mosaic_0001>
module attributes {stable_mosaic.version = 11 : i64} {
  func.func @_fconv2d_kernel(%arg0: i32, %arg1: i32, %arg2: i32, %arg3: memref<1x8x256xf32, #tpu.memory_space<vmem>>, %arg4: memref<8x4x256xf32, #tpu.memory_space<vmem>>, %arg5: memref<1x2x4x256xf32, #tpu.memory_space<vmem>>) attributes {dimension_semantics = [#tpu.dimension_semantics<parallel>, #tpu.dimension_semantics<parallel>, #tpu.dimension_semantics<parallel>], iteration_bounds = array<i64: 1, 1, 2>, scalar_prefetch = 0 : i64, scratch_operands = 0 : i64, tpu.core_type = #tpu.core_type<tc>, window_params = [{transform_indices = @transform_0, window_bounds = array<i64: 1, 8, 256>}, {transform_indices = @transform_1, window_bounds = array<i64: 8, 4, 256>}, {transform_indices = @transform_2, window_bounds = array<i64: 1, 2, 4, 256>}]} {
    %cst = arith.constant 0.000000e+00 : f32
    %0 = vector.broadcast %cst : f32 to vector<4x256xf32>
    %cst_0 = arith.constant 0.000000e+00 : f32
    %1 = vector.broadcast %cst_0 : f32 to vector<4x256xf32>
    %c0 = arith.constant 0 : index
    %c0_1 = arith.constant 0 : index
    %c0_2 = arith.constant 0 : index
    %2 = vector.load %arg4[%c0, %c0_1, %c0_2] : memref<8x4x256xf32, #tpu.memory_space<vmem>>, vector<1x4x256xf32>
    %3 = vector.shape_cast %2 : vector<1x4x256xf32> to vector<4x256xf32>
    %c4 = arith.constant 4 : index
    %c0_3 = arith.constant 0 : index
    %c0_4 = arith.constant 0 : index
    %4 = vector.load %arg4[%c4, %c0_3, %c0_4] : memref<8x4x256xf32, #tpu.memory_space<vmem>>, vector<1x4x256xf32>
    %5 = vector.shape_cast %4 : vector<1x4x256xf32> to vector<4x256xf32>
    %c0_5 = arith.constant 0 : index
    %c0_6 = arith.constant 0 : index
    %c0_7 = arith.constant 0 : index
    %6 = vector.load %arg3[%c0_5, %c0_6, %c0_7] : memref<1x8x256xf32, #tpu.memory_space<vmem>>, vector<1x1x256xf32>
    %7 = vector.shape_cast %6 : vector<1x1x256xf32> to vector<1x256xf32>
    %c0_8 = arith.constant 0 : index
    %c4_9 = arith.constant 4 : index
    %c0_10 = arith.constant 0 : index
    %8 = vector.load %arg3[%c0_8, %c4_9, %c0_10] : memref<1x8x256xf32, #tpu.memory_space<vmem>>, vector<1x1x256xf32>
    %9 = vector.shape_cast %8 : vector<1x1x256xf32> to vector<1x256xf32>
    %10 = vector.broadcast %7 : vector<1x256xf32> to vector<4x256xf32>
    %11 = arith.mulf %3, %10 : vector<4x256xf32>
    %12 = arith.addf %0, %11 : vector<4x256xf32>
    %13 = vector.broadcast %9 : vector<1x256xf32> to vector<4x256xf32>
    %14 = arith.mulf %5, %13 : vector<4x256xf32>
    %15 = arith.subf %12, %14 : vector<4x256xf32>
    %16 = vector.broadcast %9 : vector<1x256xf32> to vector<4x256xf32>
    %17 = arith.mulf %3, %16 : vector<4x256xf32>
    %18 = arith.addf %1, %17 : vector<4x256xf32>
    %19 = vector.broadcast %7 : vector<1x256xf32> to vector<4x256xf32>
    %20 = arith.mulf %5, %19 : vector<4x256xf32>
    %21 = arith.addf %18, %20 : vector<4x256xf32>
    %c1 = arith.constant 1 : index
    %c0_11 = arith.constant 0 : index
    %c0_12 = arith.constant 0 : index
    %22 = vector.load %arg4[%c1, %c0_11, %c0_12] : memref<8x4x256xf32, #tpu.memory_space<vmem>>, vector<1x4x256xf32>
    %23 = vector.shape_cast %22 : vector<1x4x256xf32> to vector<4x256xf32>
    %c5 = arith.constant 5 : index
    %c0_13 = arith.constant 0 : index
    %c0_14 = arith.constant 0 : index
    %24 = vector.load %arg4[%c5, %c0_13, %c0_14] : memref<8x4x256xf32, #tpu.memory_space<vmem>>, vector<1x4x256xf32>
    %25 = vector.shape_cast %24 : vector<1x4x256xf32> to vector<4x256xf32>
    %c0_15 = arith.constant 0 : index
    %c1_16 = arith.constant 1 : index
    %c0_17 = arith.constant 0 : index
    %26 = vector.load %arg3[%c0_15, %c1_16, %c0_17] : memref<1x8x256xf32, #tpu.memory_space<vmem>>, vector<1x1x256xf32>
    %27 = vector.shape_cast %26 : vector<1x1x256xf32> to vector<1x256xf32>
    %c0_18 = arith.constant 0 : index
    %c5_19 = arith.constant 5 : index
    %c0_20 = arith.constant 0 : index
    %28 = vector.load %arg3[%c0_18, %c5_19, %c0_20] : memref<1x8x256xf32, #tpu.memory_space<vmem>>, vector<1x1x256xf32>
    %29 = vector.shape_cast %28 : vector<1x1x256xf32> to vector<1x256xf32>
    %30 = vector.broadcast %27 : vector<1x256xf32> to vector<4x256xf32>
    %31 = arith.mulf %23, %30 : vector<4x256xf32>
    %32 = arith.addf %15, %31 : vector<4x256xf32>
    %33 = vector.broadcast %29 : vector<1x256xf32> to vector<4x256xf32>
    %34 = arith.mulf %25, %33 : vector<4x256xf32>
    %35 = arith.subf %32, %34 : vector<4x256xf32>
    %36 = vector.broadcast %29 : vector<1x256xf32> to vector<4x256xf32>
    %37 = arith.mulf %23, %36 : vector<4x256xf32>
    %38 = arith.addf %21, %37 : vector<4x256xf32>
    %39 = vector.broadcast %27 : vector<1x256xf32> to vector<4x256xf32>
    %40 = arith.mulf %25, %39 : vector<4x256xf32>
    %41 = arith.addf %38, %40 : vector<4x256xf32>
    %c2 = arith.constant 2 : index
    %c0_21 = arith.constant 0 : index
    %c0_22 = arith.constant 0 : index
    %42 = vector.load %arg4[%c2, %c0_21, %c0_22] : memref<8x4x256xf32, #tpu.memory_space<vmem>>, vector<1x4x256xf32>
    %43 = vector.shape_cast %42 : vector<1x4x256xf32> to vector<4x256xf32>
    %c6 = arith.constant 6 : index
    %c0_23 = arith.constant 0 : index
    %c0_24 = arith.constant 0 : index
    %44 = vector.load %arg4[%c6, %c0_23, %c0_24] : memref<8x4x256xf32, #tpu.memory_space<vmem>>, vector<1x4x256xf32>
    %45 = vector.shape_cast %44 : vector<1x4x256xf32> to vector<4x256xf32>
    %c0_25 = arith.constant 0 : index
    %c2_26 = arith.constant 2 : index
    %c0_27 = arith.constant 0 : index
    %46 = vector.load %arg3[%c0_25, %c2_26, %c0_27] : memref<1x8x256xf32, #tpu.memory_space<vmem>>, vector<1x1x256xf32>
    %47 = vector.shape_cast %46 : vector<1x1x256xf32> to vector<1x256xf32>
    %c0_28 = arith.constant 0 : index
    %c6_29 = arith.constant 6 : index
    %c0_30 = arith.constant 0 : index
    %48 = vector.load %arg3[%c0_28, %c6_29, %c0_30] : memref<1x8x256xf32, #tpu.memory_space<vmem>>, vector<1x1x256xf32>
    %49 = vector.shape_cast %48 : vector<1x1x256xf32> to vector<1x256xf32>
    %50 = vector.broadcast %47 : vector<1x256xf32> to vector<4x256xf32>
    %51 = arith.mulf %43, %50 : vector<4x256xf32>
    %52 = arith.addf %35, %51 : vector<4x256xf32>
    %53 = vector.broadcast %49 : vector<1x256xf32> to vector<4x256xf32>
    %54 = arith.mulf %45, %53 : vector<4x256xf32>
    %55 = arith.subf %52, %54 : vector<4x256xf32>
    %56 = vector.broadcast %49 : vector<1x256xf32> to vector<4x256xf32>
    %57 = arith.mulf %43, %56 : vector<4x256xf32>
    %58 = arith.addf %41, %57 : vector<4x256xf32>
    %59 = vector.broadcast %47 : vector<1x256xf32> to vector<4x256xf32>
    %60 = arith.mulf %45, %59 : vector<4x256xf32>
    %61 = arith.addf %58, %60 : vector<4x256xf32>
    %c3 = arith.constant 3 : index
    %c0_31 = arith.constant 0 : index
    %c0_32 = arith.constant 0 : index
    %62 = vector.load %arg4[%c3, %c0_31, %c0_32] : memref<8x4x256xf32, #tpu.memory_space<vmem>>, vector<1x4x256xf32>
    %63 = vector.shape_cast %62 : vector<1x4x256xf32> to vector<4x256xf32>
    %c7 = arith.constant 7 : index
    %c0_33 = arith.constant 0 : index
    %c0_34 = arith.constant 0 : index
    %64 = vector.load %arg4[%c7, %c0_33, %c0_34] : memref<8x4x256xf32, #tpu.memory_space<vmem>>, vector<1x4x256xf32>
    %65 = vector.shape_cast %64 : vector<1x4x256xf32> to vector<4x256xf32>
    %c0_35 = arith.constant 0 : index
    %c3_36 = arith.constant 3 : index
    %c0_37 = arith.constant 0 : index
    %66 = vector.load %arg3[%c0_35, %c3_36, %c0_37] : memref<1x8x256xf32, #tpu.memory_space<vmem>>, vector<1x1x256xf32>
    %67 = vector.shape_cast %66 : vector<1x1x256xf32> to vector<1x256xf32>
    %c0_38 = arith.constant 0 : index
    %c7_39 = arith.constant 7 : index
    %c0_40 = arith.constant 0 : index
    %68 = vector.load %arg3[%c0_38, %c7_39, %c0_40] : memref<1x8x256xf32, #tpu.memory_space<vmem>>, vector<1x1x256xf32>
    %69 = vector.shape_cast %68 : vector<1x1x256xf32> to vector<1x256xf32>
    %70 = vector.broadcast %67 : vector<1x256xf32> to vector<4x256xf32>
    %71 = arith.mulf %63, %70 : vector<4x256xf32>
    %72 = arith.addf %55, %71 : vector<4x256xf32>
    %73 = vector.broadcast %69 : vector<1x256xf32> to vector<4x256xf32>
    %74 = arith.mulf %65, %73 : vector<4x256xf32>
    %75 = arith.subf %72, %74 : vector<4x256xf32>
    %76 = vector.broadcast %69 : vector<1x256xf32> to vector<4x256xf32>
    %77 = arith.mulf %63, %76 : vector<4x256xf32>
    %78 = arith.addf %61, %77 : vector<4x256xf32>
    %79 = vector.broadcast %67 : vector<1x256xf32> to vector<4x256xf32>
    %80 = arith.mulf %65, %79 : vector<4x256xf32>
    %81 = arith.addf %78, %80 : vector<4x256xf32>
    %c0_41 = arith.constant 0 : index
    %c0_42 = arith.constant 0 : index
    %c0_43 = arith.constant 0 : index
    %c0_44 = arith.constant 0 : index
    %82 = vector.load %arg5[%c0_41, %c0_42, %c0_43, %c0_44] : memref<1x2x4x256xf32, #tpu.memory_space<vmem>>, vector<1x1x4x256xf32>
    %83 = vector.shape_cast %82 : vector<1x1x4x256xf32> to vector<4x256xf32>
    %84 = vector.shape_cast %75 : vector<4x256xf32> to vector<1x1x4x256xf32>
    tpu.vector_store %arg5[%c0_41, %c0_42, %c0_43, %c0_44], %84 {strides = array<i32>} : memref<1x2x4x256xf32, #tpu.memory_space<vmem>>, vector<1x1x4x256xf32>,
    %c0_45 = arith.constant 0 : index
    %c1_46 = arith.constant 1 : index
    %c0_47 = arith.constant 0 : index
    %c0_48 = arith.constant 0 : index
    %85 = vector.load %arg5[%c0_45, %c1_46, %c0_47, %c0_48] : memref<1x2x4x256xf32, #tpu.memory_space<vmem>>, vector<1x1x4x256xf32>
    %86 = vector.shape_cast %85 : vector<1x1x4x256xf32> to vector<4x256xf32>
    %87 = vector.shape_cast %81 : vector<4x256xf32> to vector<1x1x4x256xf32>
    tpu.vector_store %arg5[%c0_45, %c1_46, %c0_47, %c0_48], %87 {strides = array<i32>} : memref<1x2x4x256xf32, #tpu.memory_space<vmem>>, vector<1x1x4x256xf32>,
    return
  }
  func.func @transform_0(%arg0: i32, %arg1: i32, %arg2: i32) -> (i32, i32, i32) {
    %c0_i32 = arith.constant 0 : i32
    %c0_i32_0 = arith.constant 0 : i32
    return %arg2, %c0_i32, %arg1 : i32, i32, i32
  }
  func.func @transform_1(%arg0: i32, %arg1: i32, %arg2: i32) -> (i32, i32, i32) {
    %c0_i32 = arith.constant 0 : i32
    %c0_i32_0 = arith.constant 0 : i32
    return %c0_i32, %arg0, %arg1 : i32, i32, i32
  }
  func.func @transform_2(%arg0: i32, %arg1: i32, %arg2: i32) -> (i32, i32, i32, i32) {
    %c0_i32 = arith.constant 0 : i32
    %c0_i32_0 = arith.constant 0 : i32
    return %arg2, %c0_i32, %arg0, %arg1 : i32, i32, i32, i32
  }
}

</mosaic_0001>

<llo_original>
// kernel: tpu_custom_call.1
$region0: #{tpu_custom_call.1}
  #allocation0 [shape = 'u32[]', space=smem, size = 0x4, offset = 0x4, fixed_abs, tag = 'smem constant byte address 0x4 - core index']
  #allocation1 [shape = 'u32[144,128]{1,0:T(1,128)}', space=vmem, size = 0x12000, scoped, tag = 'internal scratch']
  %s0 = inlined_call_operand.hbm [shape: f32[2,8,256], index: 0, kind: input, shape index: {}]
  %s1 = inlined_call_operand.hbm [shape: f32[8,4,256], index: 1, kind: input, shape index: {}]
  %s2 = inlined_call_operand.hbm [shape: f32[2,2,4,256], index: 2, kind: output, shape index: {}]
  %s3 = sld [smem:[#allocation0]]
  $region49: #{tpu_custom_call.1} parent=0
    _
  %s5 = ssub.s32 1, %s3
  %s6 = scalar_select 0, %s5, %s3
  $region1: #{tpu_custom_call.1} parent=0
    #allocation2 [shape = 'u8[16384]{0}', space=vmem, size = 0x4000, scoped, tag = 'input window, operand 0']
    #allocation3 [shape = 's32[2]{0}', space=sflag, size = 0x8, scoped, tag = 'scoped memory for tpu_custom_call.1']
    #allocation4 [shape = 's32[2]{0}', space=sflag, size = 0x8, scoped, tag = 'scoped memory for tpu_custom_call.1']
    #allocation5 [shape = 'u8[32768]{0}', space=vmem, size = 0x8000, scoped, tag = 'input window, operand 1, single buffered']
    #allocation6 [shape = 's32[1]{0}', space=sflag, size = 0x4, scoped, tag = 'scoped memory for tpu_custom_call.1']
    #allocation7 [shape = 'u8[16384]{0}', space=vmem, size = 0x4000, scoped, tag = 'output window, operand 0']
    %7 = vsyncpa [#allocation3], 0
    %s8 = scalar_lea.sflag [#allocation3], 1
    %9 = vsyncpa %s8, 0
    %10 = vsyncpa [#allocation6], 0
    %11 = vsyncpa [#allocation4], 0
    %s12 = scalar_lea.sflag [#allocation4], 1
    %13 = vsyncpa %s12, 0
    loop: start=0, step=1, limit=4
    $region2: #{tpu_custom_call.1} parent=1 // loop_pre_header
      _
    $region3: #{tpu_custom_call.1} parent=1 // loop_header
      %s15 = sphi 0, %s19
      %p16 = scmp.ge.s32.totalorder %s15, 4
      %s22 = sphi 0, %s41
      %s23 = sphi 0, %s37
      %s24 = sphi 0, %s33
      %s25 = sphi 0, %s22
      %s26 = sphi 0, %s23
      %s27 = sphi 0, %s24
      %s28 = sphi 0, %s25
      %s29 = sphi 0, %s26
      %s30 = sphi 0, %s27
      %s46 = sphi 0, %s48
      %s49 = sphi 0, %s46
      %s50 = sphi 0, %s49
      %s66 = sphi 0, %s50
      %s74 = sphi 0, %s76
      %s77 = sphi 0, %s74
      %s78 = sphi 0, %s77
      %s94 = sphi 0, %s78
      %s104 = sphi 0, %s106
      %s107 = sphi 0, %s104
      %s108 = sphi 0, %s107
      %s124 = sphi 0, %s108
    $region4: #{tpu_custom_call.1} parent=1 // loop_header_branch
      %18 = sbr.rel (%p16) target = $region8
    $region5: #{tpu_custom_call.1} parent=1 // loop_body
      %s20 = ssub.s32 %s15, 1
      %s21 = ssub.s32 %s15, 2
      %s31 = sadd.s32 1, %s24
      %p32 = scmp.ge.s32.totalorder %s31, 2
      %s33 = scalar_select %p32, 0, %s31
      %s34 = sadd.s32 1, %s23
      %s35 = scalar_select %p32, %s34, %s23
      %p36 = scmp.ge.s32.totalorder %s35, 1
      %s37 = scalar_select %p36, 0, %s35
      %s38 = sadd.s32 1, %s22
      %s39 = scalar_select %p36, %s38, %s22
      %p40 = scmp.ge.s32.totalorder %s39, 1
      %s41 = scalar_select %p40, 0, %s39
      %s42 = ssub.s32 %s24, %s33
      %s43 = ssub.s32 %s23, %s37
      %s44 = sor.u32 %s42, %s43
      %p45 = scmp.eq.s32.totalorder %s44, 0
      %s47 = sadd.s32 %s46, 1
      %s48 = scalar_select %p45, %s46, %s47
      %p51 = pneg %p45
      %p52 = scmp.eq.s32.totalorder %s15, 1
      %p53 = por %p51, %p52
      %p54 = scmp.ne.s32.totalorder %s46, %s49
      %p55 = scmp.eq.s32.totalorder %s15, 0
      %p56 = por %p54, %p55
      %p57 = scmp.ne.s32.totalorder %s46, %s49
      %p58 = scmp.eq.s32.totalorder %s20, 1
      %p59 = por %p57, %p58
      %p60 = scmp.ne.s32.totalorder %s49, %s50
      %p61 = scmp.eq.s32.totalorder %s20, 0
      %p62 = por %p60, %p61
      %p63 = scmp.ne.s32.totalorder %s49, %s50
      %p64 = scmp.eq.s32.totalorder %s21, 1
      %p65 = por %p63, %p64
      %p67 = scmp.ne.s32.totalorder %s50, %s66
      %p68 = scmp.eq.s32.totalorder %s21, 0
      %p69 = por %p67, %p68
      %s70 = ssub.s32 %s22, %s41
      %s71 = ssub.s32 %s23, %s37
      %s72 = sor.u32 %s70, %s71
      %p73 = scmp.eq.s32.totalorder %s72, 0
      %s75 = sadd.s32 %s74, 1
      %s76 = scalar_select %p73, %s74, %s75
      %p79 = pneg %p73
      %p80 = scmp.eq.s32.totalorder %s15, 1
      %p81 = por %p79, %p80
      %p82 = scmp.ne.s32.totalorder %s74, %s77
      %p83 = scmp.eq.s32.totalorder %s15, 0
      %p84 = por %p82, %p83
      %p85 = scmp.ne.s32.totalorder %s74, %s77
      %p86 = scmp.eq.s32.totalorder %s20, 1
      %p87 = por %p85, %p86
      %p88 = scmp.ne.s32.totalorder %s77, %s78
      %p89 = scmp.eq.s32.totalorder %s20, 0
      %p90 = por %p88, %p89
      %p91 = scmp.ne.s32.totalorder %s77, %s78
      %p92 = scmp.eq.s32.totalorder %s21, 1
      %p93 = por %p91, %p92
      %p95 = scmp.ne.s32.totalorder %s78, %s94
      %p96 = scmp.eq.s32.totalorder %s21, 0
      %p97 = por %p95, %p96
      %s98 = ssub.s32 %s24, %s33
      %s99 = ssub.s32 %s22, %s41
      %s100 = sor.u32 %s98, %s99
      %s101 = ssub.s32 %s23, %s37
      %s102 = sor.u32 %s100, %s101
      %p103 = scmp.eq.s32.totalorder %s102, 0
      %s105 = sadd.s32 %s104, 1
      %s106 = scalar_select %p103, %s104, %s105
      %p109 = pneg %p103
      %p110 = scmp.eq.s32.totalorder %s15, 1
      %p111 = por %p109, %p110
      %p112 = scmp.ne.s32.totalorder %s104, %s107
      %p113 = scmp.eq.s32.totalorder %s15, 0
      %p114 = por %p112, %p113
      %p115 = scmp.ne.s32.totalorder %s104, %s107
      %p116 = scmp.eq.s32.totalorder %s20, 1
      %p117 = por %p115, %p116
      %p118 = scmp.ne.s32.totalorder %s107, %s108
      %p119 = scmp.eq.s32.totalorder %s20, 0
      %p120 = por %p118, %p119
      %p121 = scmp.ne.s32.totalorder %s107, %s108
      %p122 = scmp.eq.s32.totalorder %s21, 1
      %p123 = por %p121, %p122
      %p125 = scmp.ne.s32.totalorder %s108, %s124
      %p126 = scmp.eq.s32.totalorder %s21, 0
      %p127 = por %p125, %p126
      %p128 = scmp.le.s32.totalorder 1, %s15
      %p129 = scmp.lt.s32.totalorder %s15, 3
      %p130 = pnand %p128, %p129
      %p131 = pneg %p130
      // Predicated region
      $region9: #{tpu_custom_call.1} parent=5 // pred_check
        _
      $region10: #{tpu_custom_call.1} parent=5 // pred_check_branch
        %133 = sbr.rel (%p130) target = $region12
      $region11: #{tpu_custom_call.1} parent=5 // pred_region
        %s134 = ssub.s32 %s15, 1
        // Predicated region
        $region13: #{tpu_custom_call.1} parent=11 // pred_check
          %p135 = pneg %p90
        $region14: #{tpu_custom_call.1} parent=11 // pred_check_branch
          %137 = sbr.rel (%p135) target = $region16
        $region15: #{tpu_custom_call.1} parent=11 // pred_region
          %s138 = smul.u32 2, %s26
          %s140 = ssub.s32 1024, 1024
          %141 = vsyncadd [#allocation6], %s140
          %s142 = smul.addr %s25, 2
          %s143 = sadd.s32 %s138, %s142
          %s144 = smul.addr %s143, 64
          %s145 = scalar_lea.hbm %s1, %s144
          %s146 = sshll.u32 [#allocation5], 4
          %s147 = int_to_ptr.vmem [resolvable:$true] %s146
          %152 = dma.hbm_to_vmem [thread:$0]  %s145, 1024, %s147, [#allocation6], 128, 128, 8
        $region16: #{tpu_custom_call.1} parent=11 // pred_fallthru
          _
      $region12: #{tpu_custom_call.1} parent=5 // pred_fallthru
        _
      %p153 = scmp.lt.s32.totalorder %s15, 2
      // Predicated region
      $region17: #{tpu_custom_call.1} parent=5 // pred_check
        %p154 = pneg %p153
      $region18: #{tpu_custom_call.1} parent=5 // pred_check_branch
        %156 = sbr.rel (%p154) target = $region20
      $region19: #{tpu_custom_call.1} parent=5 // pred_region
        // Predicated region
        $region21: #{tpu_custom_call.1} parent=19 // pred_check
          %p157 = pneg %p56
        $region22: #{tpu_custom_call.1} parent=19 // pred_check_branch
          %159 = sbr.rel (%p157) target = $region24
        $region23: #{tpu_custom_call.1} parent=19 // pred_region
          %s160 = sand.u32 %s46, 1
          %s161 = scalar_lea.sflag [#allocation3], %s160
          %s162 = sand.u32 %s46, 1
          %s163 = smul.addr %s162, 16
          %s164 = scalar_lea.vmem [#allocation2], %s163
          %s165 = smul.u32 2, %s23
          %s167 = ssub.s32 256, 256
          %168 = vsyncadd %s161, %s167
          %s169 = smul.addr %s24, 2
          %s170 = sadd.s32 %s165, %s169
          %s171 = smul.addr %s170, 128
          %s172 = scalar_lea.hbm %s0, %s171
          %s174 = sshll.u32 %s164, 4
          %s175 = int_to_ptr.vmem [resolvable:$true] %s174
          %177 = dma.hbm_to_vmem [thread:$0]  %s172, 256, %s175, %s161
        $region24: #{tpu_custom_call.1} parent=19 // pred_fallthru
          _
      $region20: #{tpu_custom_call.1} parent=5 // pred_fallthru
        _
      %p178 = scmp.le.s32.totalorder 1, %s15
      %p179 = scmp.lt.s32.totalorder %s15, 3
      %p180 = pnand %p178, %p179
      %p181 = pneg %p180
      // Predicated region
      $region25: #{tpu_custom_call.1} parent=5 // pred_check
        _
      $region26: #{tpu_custom_call.1} parent=5 // pred_check_branch
        %183 = sbr.rel (%p180) target = $region28
      $region27: #{tpu_custom_call.1} parent=5 // pred_region
        %s184 = ssub.s32 %s15, 1
        %s185 = sand.u32 %s49, 1
        %s186 = scalar_lea.sflag [#allocation3], %s185
        %s187 = sand.u32 %s49, 1
        %s188 = smul.addr %s187, 16
        %s189 = scalar_lea.vmem [#allocation2], %s188
        // Predicated region
        $region29: #{tpu_custom_call.1} parent=27 // pred_check
          %p190 = pneg %p62
        $region30: #{tpu_custom_call.1} parent=27 // pred_check_branch
          %192 = sbr.rel (%p190) target = $region32
        $region31: #{tpu_custom_call.1} parent=27 // pred_region
          %193 = dma.done %s186, 256
        $region32: #{tpu_custom_call.1} parent=27 // pred_fallthru
          _
        // Predicated region
        $region33: #{tpu_custom_call.1} parent=27 // pred_check
          %p194 = pneg %p90
        $region34: #{tpu_custom_call.1} parent=27 // pred_check_branch
          %196 = sbr.rel (%p194) target = $region36
        $region35: #{tpu_custom_call.1} parent=27 // pred_region
          %197 = dma.done [#allocation6], 1024
        $region36: #{tpu_custom_call.1} parent=27 // pred_fallthru
          _
        %s198 = sand.u32 %s49, 1
        %s199 = scalar_lea.sflag [#allocation3], %s198
        %s200 = sand.u32 %s49, 1
        %s201 = smul.addr %s200, 16
        %s202 = scalar_lea.vmem [#allocation2], %s201
        %p203 = pneg %p62
        %p204 = pneg %p59
        %p205 = pneg %p90
        %p206 = pneg %p87
        %p207 = pneg %p120
        %p208 = pneg %p117
        %s209 = sand.u32 %s107, 1
        %s210 = scalar_lea.sflag [#allocation4], %s209
        %s211 = sand.u32 %s107, 1
        %s212 = smul.addr %s211, 16
        %s213 = scalar_lea.vmem [#allocation7], %s212
        %s214 = smul.u32 2, %s26
        %s215 = smul.u32 2, %s26
        %s216 = smul.u32 2, %s26
        %v217 = vld [vmem:[#allocation5] sm:$0xff]
        %s218 = scalar_lea.vmem [#allocation5], 32
        %v219 = vld [vmem:[%s218] sm:$0xff]
        %v220 = vld [vmem:[%s189] ss:$8 sm:$0x3]
        %s221 = scalar_lea.vmem %s189, 4 [#allocation2]
        %v222 = vld [vmem:[%s221] ss:$8 sm:$0x3]
        %v224 = vlaneseq
        %v225 = vshrl.u32 %v224, 7
        %v226 = vsub.s32 0, %v225
        %v227 = vrot.slane %v220, %v226
        %v228 = vlaneseq
        %v229 = vshrl.u32 %v228, 7
        %v230 = vsub.s32 1, %v229
        %v231 = vrot.slane %v220, %v230
        %v232 = vcombine.low %v227, %v231
        %v234 = vmul.f32 %v217, %v232
        %v235 = vadd.f32 %v234, 0.0
        %v237 = vlaneseq
        %v238 = vshrl.u32 %v237, 7
        %v239 = vsub.s32 0, %v238
        %v240 = vrot.slane %v222, %v239
        %v241 = vlaneseq
        %v242 = vshrl.u32 %v241, 7
        %v243 = vsub.s32 1, %v242
        %v244 = vrot.slane %v222, %v243
        %v245 = vcombine.low %v240, %v244
        %v247 = vmul.f32 %v219, %v245
        %v248 = vsub.f32 %v235, %v247
        %v249 = vmul.f32 %v217, %v245
        %v250 = vadd.f32 %v249, 0.0
        %v251 = vmul.f32 %v219, %v232
        %v252 = vadd.f32 %v250, %v251
        %s253 = scalar_lea.vmem [#allocation5], 8
        %v254 = vld [vmem:[%s253] sm:$0xff]
        %s255 = scalar_lea.vmem [#allocation5], 40
        %v256 = vld [vmem:[%s255] sm:$0xff]
        %s257 = scalar_lea.vmem %s189, 1 [#allocation2]
        %v258 = vld [vmem:[%s257] ss:$8 sm:$0x3]
        %s259 = scalar_lea.vmem %s189, 5 [#allocation2]
        %v260 = vld [vmem:[%s259] ss:$8 sm:$0x3]
        %v262 = vlaneseq
        %v263 = vshrl.u32 %v262, 7
        %v264 = vsub.s32 0, %v263
        %v265 = vrot.slane %v258, %v264
        %v266 = vlaneseq
        %v267 = vshrl.u32 %v266, 7
        %v268 = vsub.s32 1, %v267
        %v269 = vrot.slane %v258, %v268
        %v270 = vcombine.low %v265, %v269
        %v272 = vmul.f32 %v254, %v270
        %v273 = vadd.f32 %v248, %v272
        %v275 = vlaneseq
        %v276 = vshrl.u32 %v275, 7
        %v277 = vsub.s32 0, %v276
        %v278 = vrot.slane %v260, %v277
        %v279 = vlaneseq
        %v280 = vshrl.u32 %v279, 7
        %v281 = vsub.s32 1, %v280
        %v282 = vrot.slane %v260, %v281
        %v283 = vcombine.low %v278, %v282
        %v285 = vmul.f32 %v256, %v283
        %v286 = vsub.f32 %v273, %v285
        %v287 = vmul.f32 %v254, %v283
        %v288 = vadd.f32 %v252, %v287
        %v289 = vmul.f32 %v256, %v270
        %v290 = vadd.f32 %v288, %v289
        %s291 = scalar_lea.vmem [#allocation5], 16
        %v292 = vld [vmem:[%s291] sm:$0xff]
        %s293 = scalar_lea.vmem [#allocation5], 48
        %v294 = vld [vmem:[%s293] sm:$0xff]
        %s295 = scalar_lea.vmem %s189, 2 [#allocation2]
        %v296 = vld [vmem:[%s295] ss:$8 sm:$0x3]
        %s297 = scalar_lea.vmem %s189, 6 [#allocation2]
        %v298 = vld [vmem:[%s297] ss:$8 sm:$0x3]
        %v300 = vlaneseq
        %v301 = vshrl.u32 %v300, 7
        %v302 = vsub.s32 0, %v301
        %v303 = vrot.slane %v296, %v302
        %v304 = vlaneseq
        %v305 = vshrl.u32 %v304, 7
        %v306 = vsub.s32 1, %v305
        %v307 = vrot.slane %v296, %v306
        %v308 = vcombine.low %v303, %v307
        %v310 = vmul.f32 %v292, %v308
        %v311 = vadd.f32 %v286, %v310
        %v313 = vlaneseq
        %v314 = vshrl.u32 %v313, 7
        %v315 = vsub.s32 0, %v314
        %v316 = vrot.slane %v298, %v315
        %v317 = vlaneseq
        %v318 = vshrl.u32 %v317, 7
        %v319 = vsub.s32 1, %v318
        %v320 = vrot.slane %v298, %v319
        %v321 = vcombine.low %v316, %v320
        %v323 = vmul.f32 %v294, %v321
        %v324 = vsub.f32 %v311, %v323
        %v325 = vmul.f32 %v292, %v321
        %v326 = vadd.f32 %v290, %v325
        %v327 = vmul.f32 %v294, %v308
        %v328 = vadd.f32 %v326, %v327
        %s329 = scalar_lea.vmem [#allocation5], 24
        %v330 = vld [vmem:[%s329] sm:$0xff]
        %s331 = scalar_lea.vmem [#allocation5], 56
        %v332 = vld [vmem:[%s331] sm:$0xff]
        %s333 = scalar_lea.vmem %s189, 3 [#allocation2]
        %v334 = vld [vmem:[%s333] ss:$8 sm:$0x3]
        %s335 = scalar_lea.vmem %s189, 7 [#allocation2]
        %v336 = vld [vmem:[%s335] ss:$8 sm:$0x3]
        %v338 = vlaneseq
        %v339 = vshrl.u32 %v338, 7
        %v340 = vsub.s32 0, %v339
        %v341 = vrot.slane %v334, %v340
        %v342 = vlaneseq
        %v343 = vshrl.u32 %v342, 7
        %v344 = vsub.s32 1, %v343
        %v345 = vrot.slane %v334, %v344
        %v346 = vcombine.low %v341, %v345
        %v348 = vmul.f32 %v330, %v346
        %v349 = vadd.f32 %v324, %v348
        %v351 = vlaneseq
        %v352 = vshrl.u32 %v351, 7
        %v353 = vsub.s32 0, %v352
        %v354 = vrot.slane %v336, %v353
        %v355 = vlaneseq
        %v356 = vshrl.u32 %v355, 7
        %v357 = vsub.s32 1, %v356
        %v358 = vrot.slane %v336, %v357
        %v359 = vcombine.low %v354, %v358
        %v361 = vmul.f32 %v332, %v359
        %v362 = vsub.f32 %v349, %v361
        %v363 = vmul.f32 %v330, %v359
        %v364 = vadd.f32 %v328, %v363
        %v365 = vmul.f32 %v332, %v346
        %v366 = vadd.f32 %v364, %v365
        %367 = vst [vmem:[%s213] sm:$0xff] %v362
        %s368 = scalar_lea.vmem %s213, 8 [#allocation7]
        %369 = vst [vmem:[%s368] sm:$0xff] %v366
        %s370 = sand.u32 %s107, 1
        %s371 = scalar_lea.sflag [#allocation4], %s370
        %s372 = sand.u32 %s107, 1
        %s373 = smul.addr %s372, 16
        %s374 = scalar_lea.vmem [#allocation7], %s373
        // Predicated region
        $region37: #{tpu_custom_call.1} parent=27 // pred_check
          %p375 = pneg %p117
        $region38: #{tpu_custom_call.1} parent=27 // pred_check_branch
          %377 = sbr.rel (%p375) target = $region40
        $region39: #{tpu_custom_call.1} parent=27 // pred_region
          %s378 = smul.u32 2, %s26
          %s380 = ssub.s32 256, 256
          %381 = vsyncadd %s371, %s380
          %s382 = smul.addr %s25, 2
          %s383 = sadd.s32 %s378, %s382
          %s384 = smul.addr %s27, 4
          %s385 = sadd.s32 %s383, %s384
          %s386 = smul.addr %s385, 64
          %s387 = scalar_lea.hbm %s2, %s386
          %s388 = sshll.u32 %s374, 4
          %s389 = int_to_ptr.vmem [resolvable:$true] %s388
          %394 = dma.vmem_to_hbm [thread:$0]  %s389, 256, %s387, %s371, 128, 128, 8
        $region40: #{tpu_custom_call.1} parent=27 // pred_fallthru
          _
      $region28: #{tpu_custom_call.1} parent=5 // pred_fallthru
        _
      %p395 = scmp.le.s32.totalorder 2, %s15
      // Predicated region
      $region41: #{tpu_custom_call.1} parent=5 // pred_check
        %p396 = pneg %p395
      $region42: #{tpu_custom_call.1} parent=5 // pred_check_branch
        %398 = sbr.rel (%p396) target = $region44
      $region43: #{tpu_custom_call.1} parent=5 // pred_region
        %s399 = ssub.s32 %s15, 2
        // Predicated region
        $region45: #{tpu_custom_call.1} parent=43 // pred_check
          %p400 = pneg %p123
        $region46: #{tpu_custom_call.1} parent=43 // pred_check_branch
          %402 = sbr.rel (%p400) target = $region48
        $region47: #{tpu_custom_call.1} parent=43 // pred_region
          %s403 = sand.u32 %s108, 1
          %s404 = scalar_lea.sflag [#allocation4], %s403
          %s405 = sand.u32 %s108, 1
          %s406 = smul.addr %s405, 16
          %s407 = scalar_lea.vmem [#allocation7], %s406
          %408 = dma.done %s404, 256
        $region48: #{tpu_custom_call.1} parent=43 // pred_fallthru
          _
      $region44: #{tpu_custom_call.1} parent=5 // pred_fallthru
        _
    $region6: #{tpu_custom_call.1} parent=1 // loop_footer
      %s19 = sadd.s32 1, %s15
    $region7: #{tpu_custom_call.1} parent=1 // loop_footer_branch
      %14 = sbr.rel target = $region3
    $region8: #{tpu_custom_call.1} parent=1 // loop_exit
      _
    %409 = vsyncpa [#allocation3], 1
    %s410 = scalar_lea.sflag [#allocation3], 1
    %411 = vsyncpa %s410, 1
    %412 = vsyncpa [#allocation6], 1
    %413 = vsyncpa [#allocation4], 1
    %s414 = scalar_lea.sflag [#allocation4], 1
    %415 = vsyncpa %s414, 1

</llo_original>
